<compile_context>
chip_gen: v5e
topology: v5e:2x2
jax: 0.10.0
libtpu: 0.0.40
codegen_flags: <defaults>
</compile_context>

<pallas_src>
import functools

import jax
import jax.numpy as jnp
from jax.experimental import pallas as pl
from jax.experimental.pallas import tpu as pltpu

INPUT_DIM = 4
HIDDEN_DIM = 256
EMBED_DIM = 128
BN_EPS = 1e-5
NORM_EPS = 1e-12  # F.normalize clamp


def _round_up(n, m):
    return ((n + m - 1) // m) * m


def mechanism_kernel(x_ref, w1_ref, c1_ref, w2_ref, c2_ref, w3_ref, b3_ref,
                     o_ref):
    x = x_ref[...]

    # fc1 + folded bn1 (eval): K=4 contraction done as 4 unrolled VPU
    # broadcast-FMAs (BN1 scale is pre-folded into w1 columns; c1 carries the
    # fc1 bias + BN shift).
    h = x[:, 0:1] * w1_ref[0:1, :]
    for k in range(1, INPUT_DIM):
        h = h + x[:, k:k + 1] * w1_ref[k:k + 1, :]
    h = jnp.maximum(h + c1_ref[...], 0.0)

    # dropout: identity in eval mode

    # fc2 + folded bn2 (eval) + relu  (BN2 scale pre-folded into w2 columns)
    h = jnp.dot(h, w2_ref[...], preferred_element_type=jnp.float32)
    h = jnp.maximum(h + c2_ref[...], 0.0)

    # dropout: identity in eval mode

    # fc3
    z = jnp.dot(h, w3_ref[...], preferred_element_type=jnp.float32) + b3_ref[...]

    # L2 normalize along dim=1:  z / max(||z||, eps) == z * rsqrt(max(sumsq, eps^2))
    sumsq = jnp.sum(z * z, axis=1, keepdims=True)
    inv = jax.lax.rsqrt(jnp.maximum(sumsq, NORM_EPS * NORM_EPS))
    o_ref[...] = (z * inv).astype(o_ref.dtype)


def init_params(key):
    k = jax.random.split(key, 6)
    p = {
        # PyTorch Linear stores (out, in); we keep the (in, out) transpose.
        "w1": jax.random.normal(k[0], (INPUT_DIM, HIDDEN_DIM), jnp.float32) * 0.1,
        "b1": jax.random.normal(k[1], (HIDDEN_DIM,), jnp.float32) * 0.01,
        "w2": jax.random.normal(k[2], (HIDDEN_DIM, HIDDEN_DIM // 2), jnp.float32) * 0.1,
        "b2": jax.random.normal(k[3], (HIDDEN_DIM // 2,), jnp.float32) * 0.01,
        "w3": jax.random.normal(k[4], (HIDDEN_DIM // 2, EMBED_DIM), jnp.float32) * 0.1,
        "b3": jax.random.normal(k[5], (EMBED_DIM,), jnp.float32) * 0.01,
        # BatchNorm1d defaults: gamma=1, beta=0, running_mean=0, running_var=1
        "g1": jnp.ones((HIDDEN_DIM,), jnp.float32),
        "be1": jnp.zeros((HIDDEN_DIM,), jnp.float32),
        "rm1": jnp.zeros((HIDDEN_DIM,), jnp.float32),
        "rv1": jnp.ones((HIDDEN_DIM,), jnp.float32),
        "g2": jnp.ones((HIDDEN_DIM // 2,), jnp.float32),
        "be2": jnp.zeros((HIDDEN_DIM // 2,), jnp.float32),
        "rm2": jnp.zeros((HIDDEN_DIM // 2,), jnp.float32),
        "rv2": jnp.ones((HIDDEN_DIM // 2,), jnp.float32),
    }
    return p


def fold_bn_into_weights(w, fc_bias, gamma, beta, rmean, rvar):
    # bn(fc(x)) = (x@W + b - rm) * g/sqrt(rv+eps) + beta = x@(W*scale) + bias
    scale = gamma / jnp.sqrt(rvar + BN_EPS)
    w_folded = w * scale[None, :]                       # column-wise scale
    bias = (fc_bias - rmean) * scale + beta
    return w_folded, bias[None, :]


@functools.partial(jax.jit, static_argnames=("tb",))
def mechanism_forward(x, params, *, tb=1024):
    B = x.shape[0]
    H1, H2 = HIDDEN_DIM, HIDDEN_DIM // 2

    # Effective batch tile: big (default 1024, MXU-aligned) but clamped for
    # small batches; pad B up to a multiple of the tile with zero rows.
    tb_eff = min(tb, _round_up(B, 8))
    Bp = _round_up(B, tb_eff)
    if Bp != B:
        x = jnp.pad(x, ((0, Bp - B), (0, 0)))

    # Fold BN running stats + Linear biases into weights / bias vectors.
    w1f, c1 = fold_bn_into_weights(params["w1"], params["b1"], params["g1"],
                                   params["be1"], params["rm1"], params["rv1"])
    w2f, c2 = fold_bn_into_weights(params["w2"], params["b2"], params["g2"],
                                   params["be2"], params["rm2"], params["rv2"])
    w3 = params["w3"]
    b3 = params["b3"][None, :]

    grid = (Bp // tb_eff,)
    # Grid-invariant index maps -> weights/biases DMA'd once, stay in VMEM.
    full = lambda shape: pl.BlockSpec(shape, lambda i: (0, 0))

    weight_bytes = 4 * (INPUT_DIM * H1 + H1 * H2 + H2 * EMBED_DIM
                        + H1 + H2 + EMBED_DIM)
    cost = pl.CostEstimate(
        flops=2 * Bp * (INPUT_DIM * H1 + H1 * H2 + H2 * EMBED_DIM),
        transcendentals=Bp,  # one rsqrt per row
        bytes_accessed=Bp * (INPUT_DIM + EMBED_DIM) * 4 + weight_bytes,
    )

    out = pl.pallas_call(
        mechanism_kernel,
        out_shape=jax.ShapeDtypeStruct((Bp, EMBED_DIM), jnp.float32),
        grid_spec=pltpu.PrefetchScalarGridSpec(
            num_scalar_prefetch=0,
            grid=grid,
            in_specs=[
                pl.BlockSpec((tb_eff, INPUT_DIM), lambda i: (i, 0)),  # x
                full((INPUT_DIM, H1)),   # w1 * bn1 scale
                full((1, H1)),           # bn1 bias (fc1 bias folded in)
                full((H1, H2)),          # w2 * bn2 scale
                full((1, H2)),           # bn2 bias (fc2 bias folded in)
                full((H2, EMBED_DIM)),   # w3
                full((1, EMBED_DIM)),    # b3
            ],
            out_specs=pl.BlockSpec((tb_eff, EMBED_DIM), lambda i: (i, 0)),
        ),
        compiler_params=pltpu.CompilerParams(
            dimension_semantics=("parallel",)),
        cost_estimate=cost,
    )(x, w1f, c1, w2f, c2, w3, b3)

    return out[:B]


def reference_forward(x, params):
    s1 = params["g1"] / jnp.sqrt(params["rv1"] + BN_EPS)
    c1 = (params["b1"] - params["rm1"]) * s1 + params["be1"]
    s2 = params["g2"] / jnp.sqrt(params["rv2"] + BN_EPS)
    c2 = (params["b2"] - params["rm2"]) * s2 + params["be2"]
    h = jnp.maximum(x @ params["w1"] * s1[None, :] + c1[None, :], 0.0)
    h = jnp.maximum(h @ params["w2"] * s2[None, :] + c2[None, :], 0.0)
    z = h @ params["w3"] + params["b3"][None, :]
    n = jnp.sqrt(jnp.sum(z * z, axis=1, keepdims=True))
    return z / jnp.maximum(n, NORM_EPS)


if __name__ == "__main__":
    key = jax.random.PRNGKey(0)
    pkey, xkey = jax.random.split(key)
    params = init_params(pkey)

    B = 64  # small demo batch; kernel clamps/pads its batch tile automatically
    x = jax.random.normal(xkey, (B, INPUT_DIM), dtype=jnp.float32)

    out = mechanism_forward(x, params)
    out = jax.block_until_ready(out)

    ref = reference_forward(x, params)
    assert out.shape == (B, EMBED_DIM)
    assert jnp.allclose(out, ref, atol=1e-5, rtol=1e-5), "kernel mismatch vs reference"

    print("KERNEL_OK")
</pallas_src>

<mosaic_0001>
module attributes {stable_mosaic.version = 11 : i64} {
  func.func @mechanism_kernel(%arg0: i32, %arg1: memref<64x4xf32, #tpu.memory_space<vmem>>, %arg2: memref<4x256xf32, #tpu.memory_space<vmem>>, %arg3: memref<1x256xf32, #tpu.memory_space<vmem>>, %arg4: memref<256x128xf32, #tpu.memory_space<vmem>>, %arg5: memref<1x128xf32, #tpu.memory_space<vmem>>, %arg6: memref<128x128xf32, #tpu.memory_space<vmem>>, %arg7: memref<1x128xf32, #tpu.memory_space<vmem>>, %arg8: memref<64x128xf32, #tpu.memory_space<vmem>>) attributes {dimension_semantics = [#tpu.dimension_semantics<parallel>], iteration_bounds = array<i64: 1>, scalar_prefetch = 0 : i64, scratch_operands = 0 : i64, tpu.core_type = #tpu.core_type<tc>, window_params = [{transform_indices = @transform_0, window_bounds = array<i64: 64, 4>}, {pipeline_mode = #tpu.pipeline_mode<synchronous>, transform_indices = @transform_1, window_bounds = array<i64: 4, 256>}, {pipeline_mode = #tpu.pipeline_mode<synchronous>, transform_indices = @transform_2, window_bounds = array<i64: 1, 256>}, {pipeline_mode = #tpu.pipeline_mode<synchronous>, transform_indices = @transform_3, window_bounds = array<i64: 256, 128>}, {pipeline_mode = #tpu.pipeline_mode<synchronous>, transform_indices = @transform_4, window_bounds = array<i64: 1, 128>}, {pipeline_mode = #tpu.pipeline_mode<synchronous>, transform_indices = @transform_5, window_bounds = array<i64: 128, 128>}, {pipeline_mode = #tpu.pipeline_mode<synchronous>, transform_indices = @transform_6, window_bounds = array<i64: 1, 128>}, {transform_indices = @transform_7, window_bounds = array<i64: 64, 128>}]} {
    %c0 = arith.constant 0 : index
    %c0_0 = arith.constant 0 : index
    %0 = vector.load %arg1[%c0, %c0_0] : memref<64x4xf32, #tpu.memory_space<vmem>>, vector<64x4xf32>
    %1 = vector.extract_strided_slice %0 {offsets = [0, 0], sizes = [64, 1], strides = [1, 1]} : vector<64x4xf32> to vector<64x1xf32>
    %c0_1 = arith.constant 0 : index
    %c0_2 = arith.constant 0 : index
    %2 = vector.load %arg2[%c0_1, %c0_2] : memref<4x256xf32, #tpu.memory_space<vmem>>, vector<1x256xf32>
    %3 = vector.broadcast %1 : vector<64x1xf32> to vector<64x256xf32>
    %4 = vector.broadcast %2 : vector<1x256xf32> to vector<64x256xf32>
    %5 = arith.mulf %3, %4 : vector<64x256xf32>
    %6 = vector.extract_strided_slice %0 {offsets = [0, 1], sizes = [64, 1], strides = [1, 1]} : vector<64x4xf32> to vector<64x1xf32>
    %c1 = arith.constant 1 : index
    %c0_3 = arith.constant 0 : index
    %7 = vector.load %arg2[%c1, %c0_3] : memref<4x256xf32, #tpu.memory_space<vmem>>, vector<1x256xf32>
    %8 = vector.broadcast %6 : vector<64x1xf32> to vector<64x256xf32>
    %9 = vector.broadcast %7 : vector<1x256xf32> to vector<64x256xf32>
    %10 = arith.mulf %8, %9 : vector<64x256xf32>
    %11 = arith.addf %5, %10 : vector<64x256xf32>
    %12 = vector.extract_strided_slice %0 {offsets = [0, 2], sizes = [64, 1], strides = [1, 1]} : vector<64x4xf32> to vector<64x1xf32>
    %c2 = arith.constant 2 : index
    %c0_4 = arith.constant 0 : index
    %13 = vector.load %arg2[%c2, %c0_4] : memref<4x256xf32, #tpu.memory_space<vmem>>, vector<1x256xf32>
    %14 = vector.broadcast %12 : vector<64x1xf32> to vector<64x256xf32>
    %15 = vector.broadcast %13 : vector<1x256xf32> to vector<64x256xf32>
    %16 = arith.mulf %14, %15 : vector<64x256xf32>
    %17 = arith.addf %11, %16 : vector<64x256xf32>
    %18 = vector.extract_strided_slice %0 {offsets = [0, 3], sizes = [64, 1], strides = [1, 1]} : vector<64x4xf32> to vector<64x1xf32>
    %c3 = arith.constant 3 : index
    %c0_5 = arith.constant 0 : index
    %19 = vector.load %arg2[%c3, %c0_5] : memref<4x256xf32, #tpu.memory_space<vmem>>, vector<1x256xf32>
    %20 = vector.broadcast %18 : vector<64x1xf32> to vector<64x256xf32>
    %21 = vector.broadcast %19 : vector<1x256xf32> to vector<64x256xf32>
    %22 = arith.mulf %20, %21 : vector<64x256xf32>
    %23 = arith.addf %17, %22 : vector<64x256xf32>
    %c0_6 = arith.constant 0 : index
    %c0_7 = arith.constant 0 : index
    %24 = vector.load %arg3[%c0_6, %c0_7] : memref<1x256xf32, #tpu.memory_space<vmem>>, vector<1x256xf32>
    %25 = vector.broadcast %24 : vector<1x256xf32> to vector<64x256xf32>
    %26 = arith.addf %23, %25 : vector<64x256xf32>
    %cst = arith.constant 0.000000e+00 : f32
    %27 = vector.broadcast %cst : f32 to vector<64x256xf32>
    %28 = arith.maximumf %26, %27 : vector<64x256xf32>
    %c0_8 = arith.constant 0 : index
    %c0_9 = arith.constant 0 : index
    %29 = vector.load %arg4[%c0_8, %c0_9] : memref<256x128xf32, #tpu.memory_space<vmem>>, vector<256x128xf32>
    %cst_10 = arith.constant dense<0.000000e+00> : vector<64x128xf32>
    %30 = tpu.matmul %28, %29, %cst_10 {dimension_numbers = #tpu.dot_dimension_numbers<[1], [0], [0], [1], [0, 0, 1, 1], [], []>} : vector<64x256xf32>, vector<256x128xf32>, vector<64x128xf32> -> vector<64x128xf32>
    %c0_11 = arith.constant 0 : index
    %c0_12 = arith.constant 0 : index
    %31 = vector.load %arg5[%c0_11, %c0_12] : memref<1x128xf32, #tpu.memory_space<vmem>>, vector<1x128xf32>
    %32 = vector.broadcast %31 : vector<1x128xf32> to vector<64x128xf32>
    %33 = arith.addf %30, %32 : vector<64x128xf32>
    %cst_13 = arith.constant 0.000000e+00 : f32
    %34 = vector.broadcast %cst_13 : f32 to vector<64x128xf32>
    %35 = arith.maximumf %33, %34 : vector<64x128xf32>
    %c0_14 = arith.constant 0 : index
    %c0_15 = arith.constant 0 : index
    %36 = vector.load %arg6[%c0_14, %c0_15] : memref<128x128xf32, #tpu.memory_space<vmem>>, vector<128x128xf32>
    %cst_16 = arith.constant dense<0.000000e+00> : vector<64x128xf32>
    %37 = tpu.matmul %35, %36, %cst_16 {dimension_numbers = #tpu.dot_dimension_numbers<[1], [0], [0], [1], [0, 0, 1, 1], [], []>} : vector<64x128xf32>, vector<128x128xf32>, vector<64x128xf32> -> vector<64x128xf32>
    %c0_17 = arith.constant 0 : index
    %c0_18 = arith.constant 0 : index
    %38 = vector.load %arg7[%c0_17, %c0_18] : memref<1x128xf32, #tpu.memory_space<vmem>>, vector<1x128xf32>
    %39 = vector.broadcast %38 : vector<1x128xf32> to vector<64x128xf32>
    %40 = arith.addf %37, %39 : vector<64x128xf32>
    %41 = arith.mulf %40, %40 : vector<64x128xf32>
    %cst_19 = arith.constant dense<0.000000e+00> : vector<64xf32>
    %42 = vector.multi_reduction <add>, %41, %cst_19 [1] : vector<64x128xf32> to vector<64xf32>
    %43 = vector.shape_cast %42 : vector<64xf32> to vector<64x1xf32>
    %cst_20 = arith.constant 1.000000e-24 : f32
    %44 = vector.broadcast %cst_20 : f32 to vector<64x1xf32>
    %45 = arith.maximumf %43, %44 : vector<64x1xf32>
    %46 = math.rsqrt %45 : vector<64x1xf32>
    %47 = vector.broadcast %46 : vector<64x1xf32> to vector<64x128xf32>
    %48 = arith.mulf %40, %47 : vector<64x128xf32>
    %c0_21 = arith.constant 0 : index
    %c0_22 = arith.constant 0 : index
    %49 = vector.load %arg8[%c0_21, %c0_22] : memref<64x128xf32, #tpu.memory_space<vmem>>, vector<64x128xf32>
    tpu.vector_store %arg8[%c0_21, %c0_22], %48 {strides = array<i32>} : memref<64x128xf32, #tpu.memory_space<vmem>>, vector<64x128xf32>,
    return
  }
  func.func @transform_0(%arg0: i32) -> (i32, i32) {
    %c0_i32 = arith.constant 0 : i32
    %c0_i32_0 = arith.constant 0 : i32
    return %arg0, %c0_i32 : i32, i32
  }
  func.func @transform_1(%arg0: i32) -> (i32, i32) {
    %c0_i32 = arith.constant 0 : i32
    %c0_i32_0 = arith.constant 0 : i32
    %c0_i32_1 = arith.constant 0 : i32
    return %c0_i32, %c0_i32_0 : i32, i32
  }
  func.func @transform_2(%arg0: i32) -> (i32, i32) {
    %c0_i32 = arith.constant 0 : i32
    %c0_i32_0 = arith.constant 0 : i32
    %c0_i32_1 = arith.constant 0 : i32
    return %c0_i32, %c0_i32_0 : i32, i32
  }
  func.func @transform_3(%arg0: i32) -> (i32, i32) {
    %c0_i32 = arith.constant 0 : i32
    %c0_i32_0 = arith.constant 0 : i32
    %c0_i32_1 = arith.constant 0 : i32
    return %c0_i32, %c0_i32_0 : i32, i32
  }
  func.func @transform_4(%arg0: i32) -> (i32, i32) {
    %c0_i32 = arith.constant 0 : i32
    %c0_i32_0 = arith.constant 0 : i32
    %c0_i32_1 = arith.constant 0 : i32
    return %c0_i32, %c0_i32_0 : i32, i32
  }
  func.func @transform_5(%arg0: i32) -> (i32, i32) {
    %c0_i32 = arith.constant 0 : i32
    %c0_i32_0 = arith.constant 0 : i32
    %c0_i32_1 = arith.constant 0 : i32
    return %c0_i32, %c0_i32_0 : i32, i32
  }
  func.func @transform_6(%arg0: i32) -> (i32, i32) {
    %c0_i32 = arith.constant 0 : i32
    %c0_i32_0 = arith.constant 0 : i32
    %c0_i32_1 = arith.constant 0 : i32
    return %c0_i32, %c0_i32_0 : i32, i32
  }
  func.func @transform_7(%arg0: i32) -> (i32, i32) {
    %c0_i32 = arith.constant 0 : i32
    %c0_i32_0 = arith.constant 0 : i32
    return %arg0, %c0_i32 : i32, i32
  }
}

</mosaic_0001>

<llo_original>
// kernel: mechanism_forward.1
$region0: #{mechanism_forward.1}
  #allocation0 [shape = 'u32[]', space=smem, size = 0x4, offset = 0x4, fixed_abs, tag = 'smem constant byte address 0x4 - core index']
  #allocation1 [shape = 'u32[72,128]{1,0:T(1,128)}', space=vmem, size = 0x9000, scoped, tag = 'internal scratch']
  %s0 = inlined_call_operand.vmem [shape: f32[64,4], index: 0, kind: input, shape index: {}]
  %s1 = inlined_call_operand.vmem [shape: f32[4,256], index: 1, kind: input, shape index: {}]
  %s2 = inlined_call_operand.vmem [shape: f32[1,256], index: 2, kind: input, shape index: {}]
  %s3 = inlined_call_operand.vmem [shape: f32[256,128], index: 3, kind: input, shape index: {}]
  %s4 = inlined_call_operand.vmem [shape: f32[1,128], index: 4, kind: input, shape index: {}]
  %s5 = inlined_call_operand.vmem [shape: f32[128,128], index: 5, kind: input, shape index: {}]
  %s6 = inlined_call_operand.vmem [shape: f32[1,128], index: 6, kind: input, shape index: {}]
  %s7 = inlined_call_operand.hbm [shape: f32[64,128], index: 7, kind: output, shape index: {}]
  %s8 = sld [smem:[#allocation0]]
  $region38: #{mechanism_forward.1} parent=0
    _
  %s10 = ssub.s32 1, %s8
  %s11 = scalar_select 0, %s10, %s8
  $region1: #{mechanism_forward.1} parent=0
    #allocation2 [shape = 'u8[32768]{0}', space=vmem, size = 0x8000, scoped, tag = 'output window, operand 0, single buffered']
    #allocation3 [shape = 's32[1]{0}', space=sflag, size = 0x4, scoped, tag = 'scoped memory for mechanism_forward.1']
    %12 = vsyncpa [#allocation3], 0
    // Predicated region
    $region2: #{mechanism_forward.1} parent=1 // pred_check
      _
    $region3: #{mechanism_forward.1} parent=1 // pred_check_branch
      %14 = sbr.rel (0) target = $region5
    $region4: #{mechanism_forward.1} parent=1 // pred_region
      _
    $region5: #{mechanism_forward.1} parent=1 // pred_fallthru
      _
    // Predicated region
    $region6: #{mechanism_forward.1} parent=1 // pred_check
      _
    $region7: #{mechanism_forward.1} parent=1 // pred_check_branch
      %16 = sbr.rel (0) target = $region9
    $region8: #{mechanism_forward.1} parent=1 // pred_region
      _
    $region9: #{mechanism_forward.1} parent=1 // pred_fallthru
      _
    // Predicated region
    $region10: #{mechanism_forward.1} parent=1 // pred_check
      _
    $region11: #{mechanism_forward.1} parent=1 // pred_check_branch
      %18 = sbr.rel (0) target = $region13
    $region12: #{mechanism_forward.1} parent=1 // pred_region
      _
    $region13: #{mechanism_forward.1} parent=1 // pred_fallthru
      _
    // Predicated region
    $region14: #{mechanism_forward.1} parent=1 // pred_check
      _
    $region15: #{mechanism_forward.1} parent=1 // pred_check_branch
      %20 = sbr.rel (0) target = $region17
    $region16: #{mechanism_forward.1} parent=1 // pred_region
      _
    $region17: #{mechanism_forward.1} parent=1 // pred_fallthru
      _
    // Predicated region
    $region18: #{mechanism_forward.1} parent=1 // pred_check
      _
    $region19: #{mechanism_forward.1} parent=1 // pred_check_branch
      %22 = sbr.rel (0) target = $region21
    $region20: #{mechanism_forward.1} parent=1 // pred_region
      _
    $region21: #{mechanism_forward.1} parent=1 // pred_fallthru
      _
    // Predicated region
    $region22: #{mechanism_forward.1} parent=1 // pred_check
      _
    $region23: #{mechanism_forward.1} parent=1 // pred_check_branch
      %24 = sbr.rel (0) target = $region25
    $region24: #{mechanism_forward.1} parent=1 // pred_region
      _
    $region25: #{mechanism_forward.1} parent=1 // pred_fallthru
      _
    // Predicated region
    $region26: #{mechanism_forward.1} parent=1 // pred_check
      _
    $region27: #{mechanism_forward.1} parent=1 // pred_check_branch
      %26 = sbr.rel (0) target = $region29
    $region28: #{mechanism_forward.1} parent=1 // pred_region
      _
    $region29: #{mechanism_forward.1} parent=1 // pred_fallthru
      _
    %v27 = vld [vmem:[%s0] sm:$0xff]
    %v28 = vld [vmem:[%s0 + $0x8] sm:$0xff]
    %v29 = vld [vmem:[%s0 + $0x10] sm:$0xff]
    %v30 = vld [vmem:[%s0 + $0x18] sm:$0xff]
    %v31 = vld [vmem:[%s0 + $0x20] sm:$0xff]
    %v32 = vld [vmem:[%s0 + $0x28] sm:$0xff]
    %v33 = vld [vmem:[%s0 + $0x30] sm:$0xff]
    %v34 = vld [vmem:[%s0 + $0x38] sm:$0xff]
    %v35 = vld [vmem:[%s1] ss:$4 sm:$0x3]
    %37 = vset.pattern.permute.xlu0 0
    %38 = vperm.xlu0 %37, %v27
    %v39 = vpop.permute.xlu0 %38
    %42 = vset.pattern.permute.xlu0 0
    %43 = vperm.xlu0 %42, %v28
    %v44 = vpop.permute.xlu0 %43
    %47 = vset.pattern.permute.xlu0 0
    %48 = vperm.xlu0 %47, %v29
    %v49 = vpop.permute.xlu0 %48
    %52 = vset.pattern.permute.xlu0 0
    %53 = vperm.xlu0 %52, %v30
    %v54 = vpop.permute.xlu0 %53
    %57 = vset.pattern.permute.xlu0 0
    %58 = vperm.xlu0 %57, %v31
    %v59 = vpop.permute.xlu0 %58
    %62 = vset.pattern.permute.xlu0 0
    %63 = vperm.xlu0 %62, %v32
    %v64 = vpop.permute.xlu0 %63
    %67 = vset.pattern.permute.xlu0 0
    %68 = vperm.xlu0 %67, %v33
    %v69 = vpop.permute.xlu0 %68
    %72 = vset.pattern.permute.xlu0 0
    %73 = vperm.xlu0 %72, %v34
    %v74 = vpop.permute.xlu0 %73
    %v77 = vperm.slane %v35, 0
    %v78 = vperm.slane %v35, 1
    %v81 = vmul.f32 %v39, %v77
    %v82 = vmul.f32 %v39, %v78
    %v83 = vmul.f32 %v44, %v77
    %v84 = vmul.f32 %v44, %v78
    %v85 = vmul.f32 %v49, %v77
    %v86 = vmul.f32 %v49, %v78
    %v87 = vmul.f32 %v54, %v77
    %v88 = vmul.f32 %v54, %v78
    %v89 = vmul.f32 %v59, %v77
    %v90 = vmul.f32 %v59, %v78
    %v91 = vmul.f32 %v64, %v77
    %v92 = vmul.f32 %v64, %v78
    %v93 = vmul.f32 %v69, %v77
    %v94 = vmul.f32 %v69, %v78
    %v95 = vmul.f32 %v74, %v77
    %v96 = vmul.f32 %v74, %v78
    %s97 = scalar_lea.vmem %s1, 1
    %v98 = vld [vmem:[%s97] ss:$4 sm:$0x3]
    %99 = vset.pattern.permute.xlu0 1
    %100 = vperm.xlu0 %99, %v27
    %v101 = vpop.permute.xlu0 %100
    %103 = vset.pattern.permute.xlu0 1
    %104 = vperm.xlu0 %103, %v28
    %v105 = vpop.permute.xlu0 %104
    %107 = vset.pattern.permute.xlu0 1
    %108 = vperm.xlu0 %107, %v29
    %v109 = vpop.permute.xlu0 %108
    %111 = vset.pattern.permute.xlu0 1
    %112 = vperm.xlu0 %111, %v30
    %v113 = vpop.permute.xlu0 %112
    %115 = vset.pattern.permute.xlu0 1
    %116 = vperm.xlu0 %115, %v31
    %v117 = vpop.permute.xlu0 %116
    %119 = vset.pattern.permute.xlu0 1
    %120 = vperm.xlu0 %119, %v32
    %v121 = vpop.permute.xlu0 %120
    %123 = vset.pattern.permute.xlu0 1
    %124 = vperm.xlu0 %123, %v33
    %v125 = vpop.permute.xlu0 %124
    %127 = vset.pattern.permute.xlu0 1
    %128 = vperm.xlu0 %127, %v34
    %v129 = vpop.permute.xlu0 %128
    %v132 = vperm.slane %v98, 0
    %v133 = vperm.slane %v98, 1
    %v136 = vmul.f32 %v101, %v132
    %v137 = vmul.f32 %v101, %v133
    %v138 = vmul.f32 %v105, %v132
    %v139 = vmul.f32 %v105, %v133
    %v140 = vmul.f32 %v109, %v132
    %v141 = vmul.f32 %v109, %v133
    %v142 = vmul.f32 %v113, %v132
    %v143 = vmul.f32 %v113, %v133
    %v144 = vmul.f32 %v117, %v132
    %v145 = vmul.f32 %v117, %v133
    %v146 = vmul.f32 %v121, %v132
    %v147 = vmul.f32 %v121, %v133
    %v148 = vmul.f32 %v125, %v132
    %v149 = vmul.f32 %v125, %v133
    %v150 = vmul.f32 %v129, %v132
    %v151 = vmul.f32 %v129, %v133
    %v152 = vadd.f32 %v81, %v136
    %v153 = vadd.f32 %v82, %v137
    %v154 = vadd.f32 %v83, %v138
    %v155 = vadd.f32 %v84, %v139
    %v156 = vadd.f32 %v85, %v140
    %v157 = vadd.f32 %v86, %v141
    %v158 = vadd.f32 %v87, %v142
    %v159 = vadd.f32 %v88, %v143
    %v160 = vadd.f32 %v89, %v144
    %v161 = vadd.f32 %v90, %v145
    %v162 = vadd.f32 %v91, %v146
    %v163 = vadd.f32 %v92, %v147
    %v164 = vadd.f32 %v93, %v148
    %v165 = vadd.f32 %v94, %v149
    %v166 = vadd.f32 %v95, %v150
    %v167 = vadd.f32 %v96, %v151
    %s168 = scalar_lea.vmem %s1, 2
    %v169 = vld [vmem:[%s168] ss:$4 sm:$0x3]
    %170 = vset.pattern.permute.xlu0 2
    %171 = vperm.xlu0 %170, %v27
    %v172 = vpop.permute.xlu0 %171
    %174 = vset.pattern.permute.xlu0 2
    %175 = vperm.xlu0 %174, %v28
    %v176 = vpop.permute.xlu0 %175
    %178 = vset.pattern.permute.xlu0 2
    %179 = vperm.xlu0 %178, %v29
    %v180 = vpop.permute.xlu0 %179
    %182 = vset.pattern.permute.xlu0 2
    %183 = vperm.xlu0 %182, %v30
    %v184 = vpop.permute.xlu0 %183
    %186 = vset.pattern.permute.xlu0 2
    %187 = vperm.xlu0 %186, %v31
    %v188 = vpop.permute.xlu0 %187
    %190 = vset.pattern.permute.xlu0 2
    %191 = vperm.xlu0 %190, %v32
    %v192 = vpop.permute.xlu0 %191
    %194 = vset.pattern.permute.xlu0 2
    %195 = vperm.xlu0 %194, %v33
    %v196 = vpop.permute.xlu0 %195
    %198 = vset.pattern.permute.xlu0 2
    %199 = vperm.xlu0 %198, %v34
    %v200 = vpop.permute.xlu0 %199
    %v203 = vperm.slane %v169, 0
    %v204 = vperm.slane %v169, 1
    %v207 = vmul.f32 %v172, %v203
    %v208 = vmul.f32 %v172, %v204
    %v209 = vmul.f32 %v176, %v203
    %v210 = vmul.f32 %v176, %v204
    %v211 = vmul.f32 %v180, %v203
    %v212 = vmul.f32 %v180, %v204
    %v213 = vmul.f32 %v184, %v203
    %v214 = vmul.f32 %v184, %v204
    %v215 = vmul.f32 %v188, %v203
    %v216 = vmul.f32 %v188, %v204
    %v217 = vmul.f32 %v192, %v203
    %v218 = vmul.f32 %v192, %v204
    %v219 = vmul.f32 %v196, %v203
    %v220 = vmul.f32 %v196, %v204
    %v221 = vmul.f32 %v200, %v203
    %v222 = vmul.f32 %v200, %v204
    %v223 = vadd.f32 %v152, %v207
    %v224 = vadd.f32 %v153, %v208
    %v225 = vadd.f32 %v154, %v209
    %v226 = vadd.f32 %v155, %v210
    %v227 = vadd.f32 %v156, %v211
    %v228 = vadd.f32 %v157, %v212
    %v229 = vadd.f32 %v158, %v213
    %v230 = vadd.f32 %v159, %v214
    %v231 = vadd.f32 %v160, %v215
    %v232 = vadd.f32 %v161, %v216
    %v233 = vadd.f32 %v162, %v217
    %v234 = vadd.f32 %v163, %v218
    %v235 = vadd.f32 %v164, %v219
    %v236 = vadd.f32 %v165, %v220
    %v237 = vadd.f32 %v166, %v221
    %v238 = vadd.f32 %v167, %v222
    %s239 = scalar_lea.vmem %s1, 3
    %v240 = vld [vmem:[%s239] ss:$4 sm:$0x3]
    %241 = vset.pattern.permute.xlu0 3
    %242 = vperm.xlu0 %241, %v27
    %v243 = vpop.permute.xlu0 %242
    %245 = vset.pattern.permute.xlu0 3
    %246 = vperm.xlu0 %245, %v28
    %v247 = vpop.permute.xlu0 %246
    %249 = vset.pattern.permute.xlu0 3
    %250 = vperm.xlu0 %249, %v29
    %v251 = vpop.permute.xlu0 %250
    %253 = vset.pattern.permute.xlu0 3
    %254 = vperm.xlu0 %253, %v30
    %v255 = vpop.permute.xlu0 %254
    %257 = vset.pattern.permute.xlu0 3
    %258 = vperm.xlu0 %257, %v31
    %v259 = vpop.permute.xlu0 %258
    %261 = vset.pattern.permute.xlu0 3
    %262 = vperm.xlu0 %261, %v32
    %v263 = vpop.permute.xlu0 %262
    %265 = vset.pattern.permute.xlu0 3
    %266 = vperm.xlu0 %265, %v33
    %v267 = vpop.permute.xlu0 %266
    %269 = vset.pattern.permute.xlu0 3
    %270 = vperm.xlu0 %269, %v34
    %v271 = vpop.permute.xlu0 %270
    %v274 = vperm.slane %v240, 0
    %v275 = vperm.slane %v240, 1
    %v278 = vmul.f32 %v243, %v274
    %v279 = vmul.f32 %v243, %v275
    %v280 = vmul.f32 %v247, %v274
    %v281 = vmul.f32 %v247, %v275
    %v282 = vmul.f32 %v251, %v274
    %v283 = vmul.f32 %v251, %v275
    %v284 = vmul.f32 %v255, %v274
    %v285 = vmul.f32 %v255, %v275
    %v286 = vmul.f32 %v259, %v274
    %v287 = vmul.f32 %v259, %v275
    %v288 = vmul.f32 %v263, %v274
    %v289 = vmul.f32 %v263, %v275
    %v290 = vmul.f32 %v267, %v274
    %v291 = vmul.f32 %v267, %v275
    %v292 = vmul.f32 %v271, %v274
    %v293 = vmul.f32 %v271, %v275
    %v294 = vadd.f32 %v223, %v278
    %v295 = vadd.f32 %v224, %v279
    %v296 = vadd.f32 %v225, %v280
    %v297 = vadd.f32 %v226, %v281
    %v298 = vadd.f32 %v227, %v282
    %v299 = vadd.f32 %v228, %v283
    %v300 = vadd.f32 %v229, %v284
    %v301 = vadd.f32 %v230, %v285
    %v302 = vadd.f32 %v231, %v286
    %v303 = vadd.f32 %v232, %v287
    %v304 = vadd.f32 %v233, %v288
    %v305 = vadd.f32 %v234, %v289
    %v306 = vadd.f32 %v235, %v290
    %v307 = vadd.f32 %v236, %v291
    %v308 = vadd.f32 %v237, %v292
    %v309 = vadd.f32 %v238, %v293
    %v310 = vld [vmem:[%s2] sm:$0x3]
    %v312 = vperm.slane %v310, 0
    %v313 = vperm.slane %v310, 1
    %v316 = vadd.f32 %v294, %v312
    %v317 = vadd.f32 %v295, %v313
    %v318 = vadd.f32 %v296, %v312
    %v319 = vadd.f32 %v297, %v313
    %v320 = vadd.f32 %v298, %v312
    %v321 = vadd.f32 %v299, %v313
    %v322 = vadd.f32 %v300, %v312
    %v323 = vadd.f32 %v301, %v313
    %v324 = vadd.f32 %v302, %v312
    %v325 = vadd.f32 %v303, %v313
    %v326 = vadd.f32 %v304, %v312
    %v327 = vadd.f32 %v305, %v313
    %v328 = vadd.f32 %v306, %v312
    %v329 = vadd.f32 %v307, %v313
    %v330 = vadd.f32 %v308, %v312
    %v331 = vadd.f32 %v309, %v313
    %v332 = vmax.f32 %v316, 0.0
    %v333 = vmax.f32 %v317, 0.0
    %v334 = vmax.f32 %v318, 0.0
    %v335 = vmax.f32 %v319, 0.0
    %v336 = vmax.f32 %v320, 0.0
    %v337 = vmax.f32 %v321, 0.0
    %v338 = vmax.f32 %v322, 0.0
    %v339 = vmax.f32 %v323, 0.0
    %v340 = vmax.f32 %v324, 0.0
    %v341 = vmax.f32 %v325, 0.0
    %v342 = vmax.f32 %v326, 0.0
    %v343 = vmax.f32 %v327, 0.0
    %v344 = vmax.f32 %v328, 0.0
    %v345 = vmax.f32 %v329, 0.0
    %v346 = vmax.f32 %v330, 0.0
    %v347 = vmax.f32 %v331, 0.0
    %v348 = vld [vmem:[%s3] sm:$0xff]
    %v349 = vld [vmem:[%s3 + $0x8] sm:$0xff]
    %v350 = vld [vmem:[%s3 + $0x10] sm:$0xff]
    %v351 = vld [vmem:[%s3 + $0x18] sm:$0xff]
    %v352 = vld [vmem:[%s3 + $0x20] sm:$0xff]
    %v353 = vld [vmem:[%s3 + $0x28] sm:$0xff]
    %v354 = vld [vmem:[%s3 + $0x30] sm:$0xff]
    %v355 = vld [vmem:[%s3 + $0x38] sm:$0xff]
    %v356 = vld [vmem:[%s3 + $0x40] sm:$0xff]
    %v357 = vld [vmem:[%s3 + $0x48] sm:$0xff]
    %v358 = vld [vmem:[%s3 + $0x50] sm:$0xff]
    %v359 = vld [vmem:[%s3 + $0x58] sm:$0xff]
    %v360 = vld [vmem:[%s3 + $0x60] sm:$0xff]
    %v361 = vld [vmem:[%s3 + $0x68] sm:$0xff]
    %v362 = vld [vmem:[%s3 + $0x70] sm:$0xff]
    %v363 = vld [vmem:[%s3 + $0x78] sm:$0xff]
    %v364 = vld [vmem:[%s3 + $0x80] sm:$0xff]
    %v365 = vld [vmem:[%s3 + $0x88] sm:$0xff]
    %v366 = vld [vmem:[%s3 + $0x90] sm:$0xff]
    %v367 = vld [vmem:[%s3 + $0x98] sm:$0xff]
    %v368 = vld [vmem:[%s3 + $0xa0] sm:$0xff]
    %v369 = vld [vmem:[%s3 + $0xa8] sm:$0xff]
    %v370 = vld [vmem:[%s3 + $0xb0] sm:$0xff]
    %v371 = vld [vmem:[%s3 + $0xb8] sm:$0xff]
    %v372 = vld [vmem:[%s3 + $0xc0] sm:$0xff]
    %v373 = vld [vmem:[%s3 + $0xc8] sm:$0xff]
    %v374 = vld [vmem:[%s3 + $0xd0] sm:$0xff]
    %v375 = vld [vmem:[%s3 + $0xd8] sm:$0xff]
    %v376 = vld [vmem:[%s3 + $0xe0] sm:$0xff]
    %v377 = vld [vmem:[%s3 + $0xe8] sm:$0xff]
    %v378 = vld [vmem:[%s3 + $0xf0] sm:$0xff]
    %v379 = vld [vmem:[%s3 + $0xf8] sm:$0xff]
    %v380 = vld [vmem:[%s4] sm:$0x1]
    %v382 = vperm.slane %v380, 0
    %384 = vmatpush.msra.mxu0 %v363
    %385 = vmatpush.msra.mxu0 %v362
    %386 = vmatpush.msra.mxu0 %v361
    %387 = vmatpush.msra.mxu0 %v360
    %388 = vmatpush.msra.mxu0 %v359
    %389 = vmatpush.msra.mxu0 %v358
    %390 = vmatpush.msra.mxu0 %v357
    %391 = vmatpush.msra.mxu0 %v356
    %392 = vmatpush.msra.mxu0 %v355
    %393 = vmatpush.msra.mxu0 %v354
    %394 = vmatpush.msra.mxu0 %v353
    %395 = vmatpush.msra.mxu0 %v352
    %396 = vmatpush.msra.mxu0 %v351
    %397 = vmatpush.msra.mxu0 %v350
    %398 = vmatpush.msra.mxu0 %v349
    %399 = vmatpush.msra.mxu0 %v348
    %400 = vmatmul.f32.gmra.mxu0 %v332
    %v401 = vpop.f32.mrf.mxu0
    %v402 = vadd.f32 %v382, %v401
    %403 = vmatmul.f32.gmra.mxu0 %v334
    %v404 = vpop.f32.mrf.mxu0
    %v405 = vadd.f32 %v382, %v404
    %406 = vmatmul.f32.gmra.mxu0 %v336
    %v407 = vpop.f32.mrf.mxu0
    %v408 = vadd.f32 %v382, %v407
    %409 = vmatmul.f32.gmra.mxu0 %v338
    %v410 = vpop.f32.mrf.mxu0
    %v411 = vadd.f32 %v382, %v410
    %412 = vmatmul.f32.gmra.mxu0 %v340
    %v413 = vpop.f32.mrf.mxu0
    %v414 = vadd.f32 %v382, %v413
    %415 = vmatmul.f32.gmra.mxu0 %v342
    %v416 = vpop.f32.mrf.mxu0
    %v417 = vadd.f32 %v382, %v416
    %418 = vmatmul.f32.gmra.mxu0 %v344
    %v419 = vpop.f32.mrf.mxu0
    %v420 = vadd.f32 %v382, %v419
    %421 = vmatmul.f32.gmra.mxu0 %v346
    %v422 = vpop.f32.mrf.mxu0
    %v423 = vadd.f32 %v382, %v422
    %424 = vdwg.mxu0
    %425 = vmatpush.msra.mxu0 %v379
    %426 = vmatpush.msra.mxu0 %v378
    %427 = vmatpush.msra.mxu0 %v377
    %428 = vmatpush.msra.mxu0 %v376
    %429 = vmatpush.msra.mxu0 %v375
    %430 = vmatpush.msra.mxu0 %v374
    %431 = vmatpush.msra.mxu0 %v373
    %432 = vmatpush.msra.mxu0 %v372
    %433 = vmatpush.msra.mxu0 %v371
    %434 = vmatpush.msra.mxu0 %v370
    %435 = vmatpush.msra.mxu0 %v369
    %436 = vmatpush.msra.mxu0 %v368
    %437 = vmatpush.msra.mxu0 %v367
    %438 = vmatpush.msra.mxu0 %v366
    %439 = vmatpush.msra.mxu0 %v365
    %440 = vmatpush.msra.mxu0 %v364
    %441 = vmatmul.f32.gmra.mxu0 %v333
    %v442 = vpop.f32.mrf.mxu0
    %v443 = vadd.f32 %v402, %v442
    %444 = vmatmul.f32.gmra.mxu0 %v335
    %v445 = vpop.f32.mrf.mxu0
    %v446 = vadd.f32 %v405, %v445
    %447 = vmatmul.f32.gmra.mxu0 %v337
    %v448 = vpop.f32.mrf.mxu0
    %v449 = vadd.f32 %v408, %v448
    %450 = vmatmul.f32.gmra.mxu0 %v339
    %v451 = vpop.f32.mrf.mxu0
    %v452 = vadd.f32 %v411, %v451
    %453 = vmatmul.f32.gmra.mxu0 %v341
    %v454 = vpop.f32.mrf.mxu0
    %v455 = vadd.f32 %v414, %v454
    %456 = vmatmul.f32.gmra.mxu0 %v343
    %v457 = vpop.f32.mrf.mxu0
    %v458 = vadd.f32 %v417, %v457
    %459 = vmatmul.f32.gmra.mxu0 %v345
    %v460 = vpop.f32.mrf.mxu0
    %v461 = vadd.f32 %v420, %v460
    %462 = vmatmul.f32.gmra.mxu0 %v347
    %v463 = vpop.f32.mrf.mxu0
    %v464 = vadd.f32 %v423, %v463
    %465 = vdwg.mxu0
    %v466 = vmax.f32 %v443, 0.0
    %v467 = vmax.f32 %v446, 0.0
    %v468 = vmax.f32 %v449, 0.0
    %v469 = vmax.f32 %v452, 0.0
    %v470 = vmax.f32 %v455, 0.0
    %v471 = vmax.f32 %v458, 0.0
    %v472 = vmax.f32 %v461, 0.0
    %v473 = vmax.f32 %v464, 0.0
    %v474 = vld [vmem:[%s5] sm:$0xff]
    %v475 = vld [vmem:[%s5 + $0x8] sm:$0xff]
    %v476 = vld [vmem:[%s5 + $0x10] sm:$0xff]
    %v477 = vld [vmem:[%s5 + $0x18] sm:$0xff]
    %v478 = vld [vmem:[%s5 + $0x20] sm:$0xff]
    %v479 = vld [vmem:[%s5 + $0x28] sm:$0xff]
    %v480 = vld [vmem:[%s5 + $0x30] sm:$0xff]
    %v481 = vld [vmem:[%s5 + $0x38] sm:$0xff]
    %v482 = vld [vmem:[%s5 + $0x40] sm:$0xff]
    %v483 = vld [vmem:[%s5 + $0x48] sm:$0xff]
    %v484 = vld [vmem:[%s5 + $0x50] sm:$0xff]
    %v485 = vld [vmem:[%s5 + $0x58] sm:$0xff]
    %v486 = vld [vmem:[%s5 + $0x60] sm:$0xff]
    %v487 = vld [vmem:[%s5 + $0x68] sm:$0xff]
    %v488 = vld [vmem:[%s5 + $0x70] sm:$0xff]
    %v489 = vld [vmem:[%s5 + $0x78] sm:$0xff]
    %v490 = vld [vmem:[%s6] sm:$0x1]
    %v492 = vperm.slane %v490, 0
    %494 = vmatpush.msra.mxu0 %v489
    %495 = vmatpush.msra.mxu0 %v488
    %496 = vmatpush.msra.mxu0 %v487
    %497 = vmatpush.msra.mxu0 %v486
    %498 = vmatpush.msra.mxu0 %v485
    %499 = vmatpush.msra.mxu0 %v484
    %500 = vmatpush.msra.mxu0 %v483
    %501 = vmatpush.msra.mxu0 %v482
    %502 = vmatpush.msra.mxu0 %v481
    %503 = vmatpush.msra.mxu0 %v480
    %504 = vmatpush.msra.mxu0 %v479
    %505 = vmatpush.msra.mxu0 %v478
    %506 = vmatpush.msra.mxu0 %v477
    %507 = vmatpush.msra.mxu0 %v476
    %508 = vmatpush.msra.mxu0 %v475
    %509 = vmatpush.msra.mxu0 %v474
    %510 = vmatmul.f32.gmra.mxu0 %v466
    %v511 = vpop.f32.mrf.mxu0
    %v512 = vadd.f32 %v492, %v511
    %513 = vmatmul.f32.gmra.mxu0 %v467
    %v514 = vpop.f32.mrf.mxu0
    %v515 = vadd.f32 %v492, %v514
    %516 = vmatmul.f32.gmra.mxu0 %v468
    %v517 = vpop.f32.mrf.mxu0
    %v518 = vadd.f32 %v492, %v517
    %519 = vmatmul.f32.gmra.mxu0 %v469
    %v520 = vpop.f32.mrf.mxu0
    %v521 = vadd.f32 %v492, %v520
    %522 = vmatmul.f32.gmra.mxu0 %v470
    %v523 = vpop.f32.mrf.mxu0
    %v524 = vadd.f32 %v492, %v523
    %525 = vmatmul.f32.gmra.mxu0 %v471
    %v526 = vpop.f32.mrf.mxu0
    %v527 = vadd.f32 %v492, %v526
    %528 = vmatmul.f32.gmra.mxu0 %v472
    %v529 = vpop.f32.mrf.mxu0
    %v530 = vadd.f32 %v492, %v529
    %531 = vmatmul.f32.gmra.mxu0 %v473
    %v532 = vpop.f32.mrf.mxu0
    %v533 = vadd.f32 %v492, %v532
    %534 = vdwg.mxu0
    %v535 = vmul.f32 %v512, %v512
    %v536 = vmul.f32 %v515, %v515
    %v537 = vmul.f32 %v518, %v518
    %v538 = vmul.f32 %v521, %v521
    %v539 = vmul.f32 %v524, %v524
    %v540 = vmul.f32 %v527, %v527
    %v541 = vmul.f32 %v530, %v530
    %v542 = vmul.f32 %v533, %v533
    %543 = vadd.xlane.f32.xlu0 %v535
    %v544 = vpop.xlane.xlu0 %543
    %545 = vadd.xlane.f32.xlu0 %v536
    %v546 = vpop.xlane.xlu0 %545
    %547 = vadd.xlane.f32.xlu0 %v537
    %v548 = vpop.xlane.xlu0 %547
    %549 = vadd.xlane.f32.xlu0 %v538
    %v550 = vpop.xlane.xlu0 %549
    %551 = vadd.xlane.f32.xlu0 %v539
    %v552 = vpop.xlane.xlu0 %551
    %553 = vadd.xlane.f32.xlu0 %v540
    %v554 = vpop.xlane.xlu0 %553
    %555 = vadd.xlane.f32.xlu0 %v541
    %v556 = vpop.xlane.xlu0 %555
    %557 = vadd.xlane.f32.xlu0 %v542
    %v558 = vpop.xlane.xlu0 %557
    %v559 = vmax.f32 %v544, 1e-24
    %v560 = vmax.f32 %v546, 1e-24
    %v561 = vmax.f32 %v548, 1e-24
    %v562 = vmax.f32 %v550, 1e-24
    %v563 = vmax.f32 %v552, 1e-24
    %v564 = vmax.f32 %v554, 1e-24
    %v565 = vmax.f32 %v556, 1e-24
    %v566 = vmax.f32 %v558, 1e-24
    %v567 = vrsqrt.pop %v559
    %v568 = vmul.f32 %v567, %v559
    %v569 = vmul.f32 %v568, %v567
    %v570 = vmul.f32 0.5, %v569
    %v571 = vsub.f32 1.5, %v570
    %v572 = vmul.f32 %v567, %v571
    %vm573 = vweird.f32 %v559
    %vm574 = vweird.f32 %v567
    %vm575 = vmor %vm573, %vm574
    %v576 = vsel %vm575, %v567, %v572
    %v577 = vrsqrt.pop %v560
    %v578 = vmul.f32 %v577, %v560
    %v579 = vmul.f32 %v578, %v577
    %v580 = vmul.f32 0.5, %v579
    %v581 = vsub.f32 1.5, %v580
    %v582 = vmul.f32 %v577, %v581
    %vm583 = vweird.f32 %v560
    %vm584 = vweird.f32 %v577
    %vm585 = vmor %vm583, %vm584
    %v586 = vsel %vm585, %v577, %v582
    %v587 = vrsqrt.pop %v561
    %v588 = vmul.f32 %v587, %v561
    %v589 = vmul.f32 %v588, %v587
    %v590 = vmul.f32 0.5, %v589
    %v591 = vsub.f32 1.5, %v590
    %v592 = vmul.f32 %v587, %v591
    %vm593 = vweird.f32 %v561
    %vm594 = vweird.f32 %v587
    %vm595 = vmor %vm593, %vm594
    %v596 = vsel %vm595, %v587, %v592
    %v597 = vrsqrt.pop %v562
    %v598 = vmul.f32 %v597, %v562
    %v599 = vmul.f32 %v598, %v597
    %v600 = vmul.f32 0.5, %v599
    %v601 = vsub.f32 1.5, %v600
    %v602 = vmul.f32 %v597, %v601
    %vm603 = vweird.f32 %v562
    %vm604 = vweird.f32 %v597
    %vm605 = vmor %vm603, %vm604
    %v606 = vsel %vm605, %v597, %v602
    %v607 = vrsqrt.pop %v563
    %v608 = vmul.f32 %v607, %v563
    %v609 = vmul.f32 %v608, %v607
    %v610 = vmul.f32 0.5, %v609
    %v611 = vsub.f32 1.5, %v610
    %v612 = vmul.f32 %v607, %v611
    %vm613 = vweird.f32 %v563
    %vm614 = vweird.f32 %v607
    %vm615 = vmor %vm613, %vm614
    %v616 = vsel %vm615, %v607, %v612
    %v617 = vrsqrt.pop %v564
    %v618 = vmul.f32 %v617, %v564
    %v619 = vmul.f32 %v618, %v617
    %v620 = vmul.f32 0.5, %v619
    %v621 = vsub.f32 1.5, %v620
    %v622 = vmul.f32 %v617, %v621
    %vm623 = vweird.f32 %v564
    %vm624 = vweird.f32 %v617
    %vm625 = vmor %vm623, %vm624
    %v626 = vsel %vm625, %v617, %v622
    %v627 = vrsqrt.pop %v565
    %v628 = vmul.f32 %v627, %v565
    %v629 = vmul.f32 %v628, %v627
    %v630 = vmul.f32 0.5, %v629
    %v631 = vsub.f32 1.5, %v630
    %v632 = vmul.f32 %v627, %v631
    %vm633 = vweird.f32 %v565
    %vm634 = vweird.f32 %v627
    %vm635 = vmor %vm633, %vm634
    %v636 = vsel %vm635, %v627, %v632
    %v637 = vrsqrt.pop %v566
    %v638 = vmul.f32 %v637, %v566
    %v639 = vmul.f32 %v638, %v637
    %v640 = vmul.f32 0.5, %v639
    %v641 = vsub.f32 1.5, %v640
    %v642 = vmul.f32 %v637, %v641
    %vm643 = vweird.f32 %v566
    %vm644 = vweird.f32 %v637
    %vm645 = vmor %vm643, %vm644
    %v646 = vsel %vm645, %v637, %v642
    %v647 = vmul.f32 %v512, %v576
    %v648 = vmul.f32 %v515, %v586
    %v649 = vmul.f32 %v518, %v596
    %v650 = vmul.f32 %v521, %v606
    %v651 = vmul.f32 %v524, %v616
    %v652 = vmul.f32 %v527, %v626
    %v653 = vmul.f32 %v530, %v636
    %v654 = vmul.f32 %v533, %v646
    %655 = vst [vmem:[#allocation2] sm:$0xff] %v647
    %656 = vst [vmem:[#allocation2 + $0x8] sm:$0xff] %v648
    %657 = vst [vmem:[#allocation2 + $0x10] sm:$0xff] %v649
    %658 = vst [vmem:[#allocation2 + $0x18] sm:$0xff] %v650
    %659 = vst [vmem:[#allocation2 + $0x20] sm:$0xff] %v651
    %660 = vst [vmem:[#allocation2 + $0x28] sm:$0xff] %v652
    %661 = vst [vmem:[#allocation2 + $0x30] sm:$0xff] %v653
    %662 = vst [vmem:[#allocation2 + $0x38] sm:$0xff] %v654
    // Predicated region
    $region30: #{mechanism_forward.1} parent=1 // pred_check
      _
    $region31: #{mechanism_forward.1} parent=1 // pred_check_branch
      %664 = sbr.rel (0) target = $region33
    $region32: #{mechanism_forward.1} parent=1 // pred_region
      %666 = vsyncadd [#allocation3], 0
      %s667 = sshll.u32 [#allocation2], 4
      %s668 = int_to_ptr.vmem [resolvable:$true] %s667
      %s669 = sshll.u32 %s7, 4
      %s670 = int_to_ptr.hbm [resolvable:$true] %s669
      %675 = dma.vmem_to_hbm [thread:$0]  %s668, 1024, %s670, [#allocation3], 128, 128, 8
    $region33: #{mechanism_forward.1} parent=1 // pred_fallthru
      _
    // Predicated region
    $region34: #{mechanism_forward.1} parent=1 // pred_check
      _
    $region35: #{mechanism_forward.1} parent=1 // pred_check_branch
      %677 = sbr.rel (0) target = $region37
    $region36: #{mechanism_forward.1} parent=1 // pred_region
      %679 = dma.done [#allocation3], 1024
    $region37: #{mechanism_forward.1} parent=1 // pred_fallthru
      _
    %680 = vsyncpa [#allocation3], 1

</llo_original>
